<compile_context>
chip_gen: v7x
topology: tpu7x:2x2x1
jax: 0.10.0
libtpu: 0.0.40
codegen_flags: <defaults>
</compile_context>

<pallas_src>
import jax
import jax.numpy as jnp
from jax.experimental import pallas as pl
from jax.experimental.pallas import tpu as pltpu


def _round_up(x, m):
    return (x + m - 1) // m * m


def mlp_kernel(x_ref, w2t_ref, b2_ref, w3t_ref, b3_ref, o_ref):
    # fc3(relu(fc2(x))) -- the live data path of the reference forward.
    x = x_ref[...]                                             # (tb, D)
    h = jnp.dot(x, w2t_ref[...], preferred_element_type=jnp.float32)
    h = jnp.maximum(h + b2_ref[...], 0.0)                      # (tb, H_pad) f32
    y = jnp.dot(h.astype(w3t_ref.dtype), w3t_ref[...],
                preferred_element_type=jnp.float32)
    o_ref[...] = (y + b3_ref[...]).astype(o_ref.dtype)         # (tb, O_pad)


def _num_tensorcores():
    # v5e/v6e: 1 TC/chip; v7x: 2.  Fall back to 1 (single-TC tiling) if the
    # attribute is unavailable -- still correct, just skips the 2-step split.
    try:
        return max(1, int(getattr(jax.devices()[0], "num_cores", 1)))
    except Exception:
        return 1


def _vmem_capacity_bytes():
    try:
        return int(pltpu.get_tpu_info().vmem_capacity_bytes)
    except Exception:
        return 64 << 20   # conservative default (v7x per-TC VMEM)


def _pick_tile_batch(B, sublane, num_tc):
    b_al = _round_up(B, sublane)
    if num_tc <= 1 or b_al <= sublane:
        # Single-TC chips: fewest, biggest steps (each step ~0.35us overhead).
        return min(512, b_al)
    # 2-TC chips (v7x): >=2 grid steps, even count so both TCs stay loaded.
    steps = max(2, -(-b_al // 512))
    steps += steps % 2
    return _round_up(-(-b_al // steps), sublane)


def prepare_params(params, compute_dtype=jnp.float32):
    """One-time weight preprocessing (hoisted out of the per-call hot path):
    transpose to [in, out], pad feature dims to lane multiples of 128, cast.
    fc1 is dead in the reference forward and therefore dropped."""
    w1, b1, w2, b2, w3, b3 = params
    H, D = w2.shape            # fc2: (out=H, in=D); forward needs D == H
    O = w3.shape[0]
    assert D == H, "fc2(x) in the reference forward requires input_size == hidden_size"
    H_pad = _round_up(H, 128)
    O_pad = _round_up(O, 128)
    w2t = jnp.pad(w2.T, ((0, 0), (0, H_pad - H))).astype(compute_dtype)        # (D, H_pad)
    w3t = jnp.pad(w3.T, ((0, H_pad - H), (0, O_pad - O))).astype(compute_dtype)  # (H_pad, O_pad)
    b2p = jnp.pad(b2, (0, H_pad - H)).reshape(1, H_pad).astype(jnp.float32)
    b3p = jnp.pad(b3, (0, O_pad - O)).reshape(1, O_pad).astype(jnp.float32)
    return dict(w2t=w2t, b2=b2p, w3t=w3t, b3=b3p,
                D=D, H=H, O=O, H_pad=H_pad, O_pad=O_pad,
                compute_dtype=compute_dtype)


def linear_regression_forward(x, prepped, *, tb=None):
    """x: (B, input_size) float32.  `prepped` from prepare_params().
    Returns (B, output_size) float32."""
    cd = prepped["compute_dtype"]
    D, H, O = prepped["D"], prepped["H"], prepped["O"]
    H_pad, O_pad = prepped["H_pad"], prepped["O_pad"]
    B = x.shape[0]
    assert x.shape[1] == D

    itm = jnp.dtype(cd).itemsize
    sublane = 16 if itm == 2 else 8          # bf16 packs 16 sublanes per vreg
    if tb is None:
        tb = _pick_tile_batch(B, sublane, _num_tensorcores())
    tb = _round_up(tb, sublane)
    B_pad = _round_up(B, tb)

    x_p = x.astype(cd)
    if B_pad != B:
        x_p = jnp.pad(x_p, ((0, B_pad - B), (0, 0)))

    # VMEM estimate: double-buffered x / out tiles, single-buffered weights,
    # (1, N) bias blocks physically pad to 8 sublanes.
    vmem_est = (2 * tb * D * itm                         # x tile (2 bufs)
                + 2 * tb * O_pad * 4                     # out slab (2 bufs)
                + D * H_pad * itm + 8 * H_pad * 4        # W2^T + b2 (1 buf)
                + H_pad * O_pad * itm + 8 * O_pad * 4)   # W3^T + b3 (1 buf)
    vmem_cap = _vmem_capacity_bytes()
    vmem_limit = int(max(4 << 20, min(vmem_cap - (8 << 20), vmem_est + (8 << 20))))

    flops = 2 * B_pad * D * H_pad + 2 * B_pad * H_pad * O_pad
    bytes_accessed = (B_pad * D * itm + D * H_pad * itm + H_pad * O_pad * itm
                      + H_pad * 4 + O_pad * 4 + B_pad * O_pad * 4)

    def const_spec(shape):
        # index_map is (0, 0) for every grid step: single-buffer these blocks.
        return pl.BlockSpec(shape, lambda i: (0, 0), pipeline_mode=pl.Buffered(1))

    out_pad = pl.pallas_call(
        mlp_kernel,
        out_shape=jax.ShapeDtypeStruct((B_pad, O_pad), jnp.float32),
        grid_spec=pltpu.PrefetchScalarGridSpec(
            num_scalar_prefetch=0,
            grid=(B_pad // tb,),
            in_specs=[
                pl.BlockSpec((tb, D), lambda i: (i, 0)),   # x tile (K unpadded)
                const_spec((D, H_pad)),                    # W2^T (resident)
                const_spec((1, H_pad)),                    # b2
                const_spec((H_pad, O_pad)),                # W3^T (resident)
                const_spec((1, O_pad)),                    # b3
            ],
            out_specs=pl.BlockSpec((tb, O_pad), lambda i: (i, 0)),
        ),
        compiler_params=pltpu.CompilerParams(
            dimension_semantics=("parallel",),
            vmem_limit_bytes=vmem_limit),
        cost_estimate=pl.CostEstimate(flops=flops, transcendentals=0,
                                      bytes_accessed=bytes_accessed),
    )(x_p, prepped["w2t"], prepped["b2"], prepped["w3t"], prepped["b3"])

    return out_pad[:B, :O]


def init_params(key, input_size, hidden_size, output_size):
    """PyTorch nn.Linear default init: U(-1/sqrt(fan_in), 1/sqrt(fan_in))."""
    def linear(k, fan_out, fan_in):
        kw, kb = jax.random.split(k)
        bound = 1.0 / jnp.sqrt(fan_in)
        w = jax.random.uniform(kw, (fan_out, fan_in), jnp.float32, -bound, bound)
        b = jax.random.uniform(kb, (fan_out,), jnp.float32, -bound, bound)
        return w, b

    k1, k2, k3 = jax.random.split(key, 3)
    w1, b1 = linear(k1, hidden_size, input_size)
    w2, b2 = linear(k2, hidden_size, hidden_size)
    w3, b3 = linear(k3, output_size, hidden_size)
    return (w1, b1, w2, b2, w3, b3)


def reference_forward(x, params):
    """Pure-JAX replica of the PyTorch forward (effective path)."""
    w1, b1, w2, b2, w3, b3 = params
    out = x @ w1.T + b1                       # dead
    out = jnp.maximum(x @ w1.T + b1, 0.0)     # dead after next overwrite chain
    out = out @ w2.T + b2                     # dead
    out = jnp.maximum(x @ w2.T + b2, 0.0)
    out = out @ w3.T + b3
    return out


if __name__ == "__main__":
    batch = 512
    input_size = 32
    hidden_size = 32   # must equal input_size for fc2(x) in the reference forward
    output_size = 1

    key = jax.random.PRNGKey(0)
    kx, kp = jax.random.split(key)
    x = jax.random.normal(kx, (batch, input_size), jnp.float32)
    params = init_params(kp, input_size, hidden_size, output_size)
    ref = reference_forward(x, params)

    # f32 path (matches PyTorch numerics to tight tolerance).
    prepped_f32 = prepare_params(params, jnp.float32)
    out = jax.block_until_ready(linear_regression_forward(x, prepped_f32))
    assert out.shape == (batch, output_size)
    assert jnp.allclose(out, ref, atol=2e-5, rtol=2e-5)

    # bf16 MXU path (f32 accumulation + f32 epilogue) -- looser tolerance.
    prepped_bf16 = prepare_params(params, jnp.bfloat16)
    out_bf16 = jax.block_until_ready(linear_regression_forward(x, prepped_bf16))
    assert out_bf16.shape == (batch, output_size)
    assert jnp.allclose(out_bf16, ref, atol=5e-2, rtol=5e-2)

    print("KERNEL_OK")
</pallas_src>

<mosaic_0001>
module attributes {stable_mosaic.version = 11 : i64} {
  func.func @mlp_kernel(%arg0: i32, %arg1: memref<512x32xf32, #tpu.memory_space<vmem>>, %arg2: memref<32x128xf32, #tpu.memory_space<vmem>>, %arg3: memref<1x128xf32, #tpu.memory_space<vmem>>, %arg4: memref<128x128xf32, #tpu.memory_space<vmem>>, %arg5: memref<1x128xf32, #tpu.memory_space<vmem>>, %arg6: memref<512x128xf32, #tpu.memory_space<vmem>>) attributes {dimension_semantics = [#tpu.dimension_semantics<parallel>], iteration_bounds = array<i64: 1>, scalar_prefetch = 0 : i64, scratch_operands = 0 : i64, tpu.core_type = #tpu.core_type<tc>, window_params = [{transform_indices = @transform_0, window_bounds = array<i64: 512, 32>}, {pipeline_mode = #tpu.pipeline_mode<synchronous>, transform_indices = @transform_1, window_bounds = array<i64: 32, 128>}, {pipeline_mode = #tpu.pipeline_mode<synchronous>, transform_indices = @transform_2, window_bounds = array<i64: 1, 128>}, {pipeline_mode = #tpu.pipeline_mode<synchronous>, transform_indices = @transform_3, window_bounds = array<i64: 128, 128>}, {pipeline_mode = #tpu.pipeline_mode<synchronous>, transform_indices = @transform_4, window_bounds = array<i64: 1, 128>}, {transform_indices = @transform_5, window_bounds = array<i64: 512, 128>}]} {
    %c0 = arith.constant 0 : index
    %c0_0 = arith.constant 0 : index
    %0 = vector.load %arg1[%c0, %c0_0] : memref<512x32xf32, #tpu.memory_space<vmem>>, vector<512x32xf32>
    %c0_1 = arith.constant 0 : index
    %c0_2 = arith.constant 0 : index
    %1 = vector.load %arg2[%c0_1, %c0_2] : memref<32x128xf32, #tpu.memory_space<vmem>>, vector<32x128xf32>
    %cst = arith.constant dense<0.000000e+00> : vector<512x128xf32>
    %2 = tpu.matmul %0, %1, %cst {dimension_numbers = #tpu.dot_dimension_numbers<[1], [0], [0], [1], [0, 0, 1, 1], [], []>} : vector<512x32xf32>, vector<32x128xf32>, vector<512x128xf32> -> vector<512x128xf32>
    %c0_3 = arith.constant 0 : index
    %c0_4 = arith.constant 0 : index
    %3 = vector.load %arg3[%c0_3, %c0_4] : memref<1x128xf32, #tpu.memory_space<vmem>>, vector<1x128xf32>
    %4 = vector.broadcast %3 : vector<1x128xf32> to vector<512x128xf32>
    %5 = arith.addf %2, %4 : vector<512x128xf32>
    %cst_5 = arith.constant 0.000000e+00 : f32
    %6 = vector.broadcast %cst_5 : f32 to vector<512x128xf32>
    %7 = arith.maximumf %5, %6 : vector<512x128xf32>
    %c0_6 = arith.constant 0 : index
    %c0_7 = arith.constant 0 : index
    %8 = vector.load %arg4[%c0_6, %c0_7] : memref<128x128xf32, #tpu.memory_space<vmem>>, vector<128x128xf32>
    %cst_8 = arith.constant dense<0.000000e+00> : vector<512x128xf32>
    %9 = tpu.matmul %7, %8, %cst_8 {dimension_numbers = #tpu.dot_dimension_numbers<[1], [0], [0], [1], [0, 0, 1, 1], [], []>} : vector<512x128xf32>, vector<128x128xf32>, vector<512x128xf32> -> vector<512x128xf32>
    %c0_9 = arith.constant 0 : index
    %c0_10 = arith.constant 0 : index
    %10 = vector.load %arg5[%c0_9, %c0_10] : memref<1x128xf32, #tpu.memory_space<vmem>>, vector<1x128xf32>
    %11 = vector.broadcast %10 : vector<1x128xf32> to vector<512x128xf32>
    %12 = arith.addf %9, %11 : vector<512x128xf32>
    %c0_11 = arith.constant 0 : index
    %c0_12 = arith.constant 0 : index
    %13 = vector.load %arg6[%c0_11, %c0_12] : memref<512x128xf32, #tpu.memory_space<vmem>>, vector<512x128xf32>
    tpu.vector_store %arg6[%c0_11, %c0_12], %12 {strides = array<i32>} : memref<512x128xf32, #tpu.memory_space<vmem>>, vector<512x128xf32>,
    return
  }
  func.func @transform_0(%arg0: i32) -> (i32, i32) {
    %c0_i32 = arith.constant 0 : i32
    %c0_i32_0 = arith.constant 0 : i32
    return %arg0, %c0_i32 : i32, i32
  }
  func.func @transform_1(%arg0: i32) -> (i32, i32) {
    %c0_i32 = arith.constant 0 : i32
    %c0_i32_0 = arith.constant 0 : i32
    %c0_i32_1 = arith.constant 0 : i32
    return %c0_i32, %c0_i32_0 : i32, i32
  }
  func.func @transform_2(%arg0: i32) -> (i32, i32) {
    %c0_i32 = arith.constant 0 : i32
    %c0_i32_0 = arith.constant 0 : i32
    %c0_i32_1 = arith.constant 0 : i32
    return %c0_i32, %c0_i32_0 : i32, i32
  }
  func.func @transform_3(%arg0: i32) -> (i32, i32) {
    %c0_i32 = arith.constant 0 : i32
    %c0_i32_0 = arith.constant 0 : i32
    %c0_i32_1 = arith.constant 0 : i32
    return %c0_i32, %c0_i32_0 : i32, i32
  }
  func.func @transform_4(%arg0: i32) -> (i32, i32) {
    %c0_i32 = arith.constant 0 : i32
    %c0_i32_0 = arith.constant 0 : i32
    %c0_i32_1 = arith.constant 0 : i32
    return %c0_i32, %c0_i32_0 : i32, i32
  }
  func.func @transform_5(%arg0: i32) -> (i32, i32) {
    %c0_i32 = arith.constant 0 : i32
    %c0_i32_0 = arith.constant 0 : i32
    return %arg0, %c0_i32 : i32, i32
  }
}

</mosaic_0001>

<llo_original>
// kernel: tpu_custom_call.1
$region0: #{tpu_custom_call.1}
  #allocation0 [shape = 'u32[]', space=smem, size = 0x4, offset = 0x4, fixed_abs, tag = 'smem constant byte address 0x4 - core index']
  #allocation1 [shape = 'u32[144,128]{1,0:T(1,128)}', space=vmem, size = 0x12000, scoped, tag = 'internal scratch']
  %s0 = inlined_call_operand.vmem [shape: f32[512,32], index: 0, kind: input, shape index: {}]
  %s1 = inlined_call_operand.vmem [shape: f32[32,128], index: 1, kind: input, shape index: {}]
  %s2 = inlined_call_operand.vmem [shape: f32[1,128], index: 2, kind: input, shape index: {}]
  %s3 = inlined_call_operand.vmem [shape: f32[128,128], index: 3, kind: input, shape index: {}]
  %s4 = inlined_call_operand.vmem [shape: f32[1,128], index: 4, kind: input, shape index: {}]
  %s5 = inlined_call_operand.hbm [shape: f32[512,128], index: 5, kind: output, shape index: {}]
  %s6 = sld [smem:[#allocation0]]
  $region30: #{tpu_custom_call.1} parent=0
    _
  %s8 = ssub.s32 1, %s6
  %s9 = scalar_select 0, %s8, %s6
  $region1: #{tpu_custom_call.1} parent=0
    #allocation2 [shape = 'u8[262144]{0}', space=vmem, size = 0x40000, scoped, tag = 'output window, operand 0, single buffered']
    #allocation3 [shape = 's32[1]{0}', space=sflag, size = 0x4, scoped, tag = 'scoped memory for tpu_custom_call.1']
    %10 = vsyncpa [#allocation3], 0
    // Predicated region
    $region2: #{tpu_custom_call.1} parent=1 // pred_check
      _
    $region3: #{tpu_custom_call.1} parent=1 // pred_check_branch
      %12 = sbr.rel (0) target = $region5
    $region4: #{tpu_custom_call.1} parent=1 // pred_region
      _
    $region5: #{tpu_custom_call.1} parent=1 // pred_fallthru
      _
    // Predicated region
    $region6: #{tpu_custom_call.1} parent=1 // pred_check
      _
    $region7: #{tpu_custom_call.1} parent=1 // pred_check_branch
      %14 = sbr.rel (0) target = $region9
    $region8: #{tpu_custom_call.1} parent=1 // pred_region
      _
    $region9: #{tpu_custom_call.1} parent=1 // pred_fallthru
      _
    // Predicated region
    $region10: #{tpu_custom_call.1} parent=1 // pred_check
      _
    $region11: #{tpu_custom_call.1} parent=1 // pred_check_branch
      %16 = sbr.rel (0) target = $region13
    $region12: #{tpu_custom_call.1} parent=1 // pred_region
      _
    $region13: #{tpu_custom_call.1} parent=1 // pred_fallthru
      _
    // Predicated region
    $region14: #{tpu_custom_call.1} parent=1 // pred_check
      _
    $region15: #{tpu_custom_call.1} parent=1 // pred_check_branch
      %18 = sbr.rel (0) target = $region17
    $region16: #{tpu_custom_call.1} parent=1 // pred_region
      _
    $region17: #{tpu_custom_call.1} parent=1 // pred_fallthru
      _
    // Predicated region
    $region18: #{tpu_custom_call.1} parent=1 // pred_check
      _
    $region19: #{tpu_custom_call.1} parent=1 // pred_check_branch
      %20 = sbr.rel (0) target = $region21
    $region20: #{tpu_custom_call.1} parent=1 // pred_region
      _
    $region21: #{tpu_custom_call.1} parent=1 // pred_fallthru
      _
    %v21 = vld [vmem:[%s0] sm:$0xff]
    %v22 = vld [vmem:[%s0 + $0x8] sm:$0xff]
    %v23 = vld [vmem:[%s0 + $0x10] sm:$0xff]
    %v24 = vld [vmem:[%s0 + $0x18] sm:$0xff]
    %v25 = vld [vmem:[%s0 + $0x20] sm:$0xff]
    %v26 = vld [vmem:[%s0 + $0x28] sm:$0xff]
    %v27 = vld [vmem:[%s0 + $0x30] sm:$0xff]
    %v28 = vld [vmem:[%s0 + $0x38] sm:$0xff]
    %v29 = vld [vmem:[%s0 + $0x40] sm:$0xff]
    %v30 = vld [vmem:[%s0 + $0x48] sm:$0xff]
    %v31 = vld [vmem:[%s0 + $0x50] sm:$0xff]
    %v32 = vld [vmem:[%s0 + $0x58] sm:$0xff]
    %v33 = vld [vmem:[%s0 + $0x60] sm:$0xff]
    %v34 = vld [vmem:[%s0 + $0x68] sm:$0xff]
    %v35 = vld [vmem:[%s0 + $0x70] sm:$0xff]
    %v36 = vld [vmem:[%s0 + $0x78] sm:$0xff]
    %v37 = vld [vmem:[%s0 + $0x80] sm:$0xff]
    %v38 = vld [vmem:[%s0 + $0x88] sm:$0xff]
    %v39 = vld [vmem:[%s0 + $0x90] sm:$0xff]
    %v40 = vld [vmem:[%s0 + $0x98] sm:$0xff]
    %v41 = vld [vmem:[%s0 + $0xa0] sm:$0xff]
    %v42 = vld [vmem:[%s0 + $0xa8] sm:$0xff]
    %v43 = vld [vmem:[%s0 + $0xb0] sm:$0xff]
    %v44 = vld [vmem:[%s0 + $0xb8] sm:$0xff]
    %v45 = vld [vmem:[%s0 + $0xc0] sm:$0xff]
    %v46 = vld [vmem:[%s0 + $0xc8] sm:$0xff]
    %v47 = vld [vmem:[%s0 + $0xd0] sm:$0xff]
    %v48 = vld [vmem:[%s0 + $0xd8] sm:$0xff]
    %v49 = vld [vmem:[%s0 + $0xe0] sm:$0xff]
    %v50 = vld [vmem:[%s0 + $0xe8] sm:$0xff]
    %v51 = vld [vmem:[%s0 + $0xf0] sm:$0xff]
    %v52 = vld [vmem:[%s0 + $0xf8] sm:$0xff]
    %v53 = vld [vmem:[%s0 + $0x100] sm:$0xff]
    %v54 = vld [vmem:[%s0 + $0x108] sm:$0xff]
    %v55 = vld [vmem:[%s0 + $0x110] sm:$0xff]
    %v56 = vld [vmem:[%s0 + $0x118] sm:$0xff]
    %v57 = vld [vmem:[%s0 + $0x120] sm:$0xff]
    %v58 = vld [vmem:[%s0 + $0x128] sm:$0xff]
    %v59 = vld [vmem:[%s0 + $0x130] sm:$0xff]
    %v60 = vld [vmem:[%s0 + $0x138] sm:$0xff]
    %v61 = vld [vmem:[%s0 + $0x140] sm:$0xff]
    %v62 = vld [vmem:[%s0 + $0x148] sm:$0xff]
    %v63 = vld [vmem:[%s0 + $0x150] sm:$0xff]
    %v64 = vld [vmem:[%s0 + $0x158] sm:$0xff]
    %v65 = vld [vmem:[%s0 + $0x160] sm:$0xff]
    %v66 = vld [vmem:[%s0 + $0x168] sm:$0xff]
    %v67 = vld [vmem:[%s0 + $0x170] sm:$0xff]
    %v68 = vld [vmem:[%s0 + $0x178] sm:$0xff]
    %v69 = vld [vmem:[%s0 + $0x180] sm:$0xff]
    %v70 = vld [vmem:[%s0 + $0x188] sm:$0xff]
    %v71 = vld [vmem:[%s0 + $0x190] sm:$0xff]
    %v72 = vld [vmem:[%s0 + $0x198] sm:$0xff]
    %v73 = vld [vmem:[%s0 + $0x1a0] sm:$0xff]
    %v74 = vld [vmem:[%s0 + $0x1a8] sm:$0xff]
    %v75 = vld [vmem:[%s0 + $0x1b0] sm:$0xff]
    %v76 = vld [vmem:[%s0 + $0x1b8] sm:$0xff]
    %v77 = vld [vmem:[%s0 + $0x1c0] sm:$0xff]
    %v78 = vld [vmem:[%s0 + $0x1c8] sm:$0xff]
    %v79 = vld [vmem:[%s0 + $0x1d0] sm:$0xff]
    %v80 = vld [vmem:[%s0 + $0x1d8] sm:$0xff]
    %v81 = vld [vmem:[%s0 + $0x1e0] sm:$0xff]
    %v82 = vld [vmem:[%s0 + $0x1e8] sm:$0xff]
    %v83 = vld [vmem:[%s0 + $0x1f0] sm:$0xff]
    %v84 = vld [vmem:[%s0 + $0x1f8] sm:$0xff]
    %v85 = vld [vmem:[%s1] sm:$0xff]
    %v86 = vld [vmem:[%s1 + $0x8] sm:$0xff]
    %v87 = vld [vmem:[%s1 + $0x10] sm:$0xff]
    %v88 = vld [vmem:[%s1 + $0x18] sm:$0xff]
    %v89 = vld [vmem:[%s2] sm:$0x1]
    %v91 = vlaneseq
    %v92 = vshrl.u32 %v91, 7
    %v93 = vsub.s32 0, %v92
    %v94 = vrot.slane %v89, %v93
    %vm96 = vcmask 261120
    %v98 = vsel %vm96, %v21, 0
    %v101 = vsel %vm96, %v22, 0
    %v104 = vsel %vm96, %v23, 0
    %v107 = vsel %vm96, %v24, 0
    %v110 = vsel %vm96, %v25, 0
    %v113 = vsel %vm96, %v26, 0
    %v116 = vsel %vm96, %v27, 0
    %v119 = vsel %vm96, %v28, 0
    %v122 = vsel %vm96, %v29, 0
    %v125 = vsel %vm96, %v30, 0
    %v128 = vsel %vm96, %v31, 0
    %v131 = vsel %vm96, %v32, 0
    %v134 = vsel %vm96, %v33, 0
    %v137 = vsel %vm96, %v34, 0
    %v140 = vsel %vm96, %v35, 0
    %v143 = vsel %vm96, %v36, 0
    %v146 = vsel %vm96, %v37, 0
    %v149 = vsel %vm96, %v38, 0
    %v152 = vsel %vm96, %v39, 0
    %v155 = vsel %vm96, %v40, 0
    %v158 = vsel %vm96, %v41, 0
    %v161 = vsel %vm96, %v42, 0
    %v164 = vsel %vm96, %v43, 0
    %v167 = vsel %vm96, %v44, 0
    %v170 = vsel %vm96, %v45, 0
    %v173 = vsel %vm96, %v46, 0
    %v176 = vsel %vm96, %v47, 0
    %v179 = vsel %vm96, %v48, 0
    %v182 = vsel %vm96, %v49, 0
    %v185 = vsel %vm96, %v50, 0
    %v188 = vsel %vm96, %v51, 0
    %v191 = vsel %vm96, %v52, 0
    %v194 = vsel %vm96, %v53, 0
    %v197 = vsel %vm96, %v54, 0
    %v200 = vsel %vm96, %v55, 0
    %v203 = vsel %vm96, %v56, 0
    %v206 = vsel %vm96, %v57, 0
    %v209 = vsel %vm96, %v58, 0
    %v212 = vsel %vm96, %v59, 0
    %v215 = vsel %vm96, %v60, 0
    %v218 = vsel %vm96, %v61, 0
    %v221 = vsel %vm96, %v62, 0
    %v224 = vsel %vm96, %v63, 0
    %v227 = vsel %vm96, %v64, 0
    %v230 = vsel %vm96, %v65, 0
    %v233 = vsel %vm96, %v66, 0
    %v236 = vsel %vm96, %v67, 0
    %v239 = vsel %vm96, %v68, 0
    %v242 = vsel %vm96, %v69, 0
    %v245 = vsel %vm96, %v70, 0
    %v248 = vsel %vm96, %v71, 0
    %v251 = vsel %vm96, %v72, 0
    %v254 = vsel %vm96, %v73, 0
    %v257 = vsel %vm96, %v74, 0
    %v260 = vsel %vm96, %v75, 0
    %v263 = vsel %vm96, %v76, 0
    %v266 = vsel %vm96, %v77, 0
    %v269 = vsel %vm96, %v78, 0
    %v272 = vsel %vm96, %v79, 0
    %v275 = vsel %vm96, %v80, 0
    %v278 = vsel %vm96, %v81, 0
    %v281 = vsel %vm96, %v82, 0
    %v284 = vsel %vm96, %v83, 0
    %v287 = vsel %vm96, %v84, 0
    %289 = vmatprep.subr.mxu0 0.0
    %290 = vmatpush1.msra.mxu0 %v85
    %291 = vmatprep.subr.mxu0 0.0
    %292 = vmatpush1.msra.mxu0 %v86
    %293 = vmatprep.subr.mxu0 0.0
    %294 = vmatpush1.msra.mxu0 %v87
    %295 = vmatprep.subr.mxu0 0.0
    %296 = vmatpush1.msra.mxu0 %v88
    %297 = vmatprep.subr.mxu0 0.0
    %298 = vmatpush1.msra.mxu0 0.0
    %299 = vmatprep.subr.mxu0 0.0
    %300 = vmatpush1.msra.mxu0 0.0
    %301 = vmatprep.subr.mxu0 0.0
    %302 = vmatpush1.msra.mxu0 0.0
    %303 = vmatprep.subr.mxu0 0.0
    %304 = vmatpush1.msra.mxu0 0.0
    %305 = vmatprep.subr.mxu0 0.0
    %306 = vmatpush1.msra.mxu0 0.0
    %307 = vmatprep.subr.mxu0 0.0
    %308 = vmatpush1.msra.mxu0 0.0
    %309 = vmatprep.subr.mxu0 0.0
    %310 = vmatpush1.msra.mxu0 0.0
    %311 = vmatprep.subr.mxu0 0.0
    %312 = vmatpush1.msra.mxu0 0.0
    %313 = vmatprep.subr.mxu0 0.0
    %314 = vmatpush1.msra.mxu0 0.0
    %315 = vmatprep.subr.mxu0 0.0
    %316 = vmatpush1.msra.mxu0 0.0
    %317 = vmatprep.subr.mxu0 0.0
    %318 = vmatpush1.msra.mxu0 0.0
    %319 = vmatprep.subr.mxu0 0.0
    %320 = vmatpush1.msra.mxu0 0.0
    %321 = vmatprep.subr.mxu0 0.0
    %322 = vmatpush1.msra.mxu0 0.0
    %323 = vmatprep.subr.mxu0 0.0
    %324 = vmatpush1.msra.mxu0 0.0
    %325 = vmatprep.subr.mxu0 0.0
    %326 = vmatpush1.msra.mxu0 0.0
    %327 = vmatprep.subr.mxu0 0.0
    %328 = vmatpush1.msra.mxu0 0.0
    %329 = vmatprep.subr.mxu0 0.0
    %330 = vmatpush1.msra.mxu0 0.0
    %331 = vmatprep.subr.mxu0 0.0
    %332 = vmatpush1.msra.mxu0 0.0
    %333 = vmatprep.subr.mxu0 0.0
    %334 = vmatpush1.msra.mxu0 0.0
    %335 = vmatprep.subr.mxu0 0.0
    %336 = vmatpush1.msra.mxu0 0.0
    %337 = vmatprep.subr.mxu0 0.0
    %338 = vmatpush1.msra.mxu0 0.0
    %339 = vmatprep.subr.mxu0 0.0
    %340 = vmatpush1.msra.mxu0 0.0
    %341 = vmatprep.subr.mxu0 0.0
    %342 = vmatpush1.msra.mxu0 0.0
    %343 = vmatprep.subr.mxu0 0.0
    %344 = vmatpush1.msra.mxu0 0.0
    %345 = vmatprep.subr.mxu0 0.0
    %346 = vmatpush1.msra.mxu0 0.0
    %347 = vmatprep.subr.mxu0 0.0
    %348 = vmatpush1.msra.mxu0 0.0
    %349 = vmatprep.subr.mxu0 0.0
    %350 = vmatpush1.msra.mxu0 0.0
    %351 = vmatprep.subr.mxu0 0.0
    %352 = vmatpush1.msra.mxu0 0.0
    %353 = vmatprep.mubr.f32.mxu0 0.0
    %354 = vmatmul.mubr.f32.gmra.mrb[0].mxu0 %v98
    %v355 = vpop.f32.mrb[0].mxu0
    %v356 = vadd.f32 %v94, %v355
    %v357 = vpop.f32.mrb[0].mxu0
    %358 = vmatprep.mubr.f32.mxu0 0.0
    %359 = vmatmul.mubr.f32.gmra.mrb[0].mxu0 %v101
    %v360 = vpop.f32.mrb[0].mxu0
    %v361 = vadd.f32 %v94, %v360
    %v362 = vpop.f32.mrb[0].mxu0
    %363 = vmatprep.mubr.f32.mxu0 0.0
    %364 = vmatmul.mubr.f32.gmra.mrb[0].mxu0 %v104
    %v365 = vpop.f32.mrb[0].mxu0
    %v366 = vadd.f32 %v94, %v365
    %v367 = vpop.f32.mrb[0].mxu0
    %368 = vmatprep.mubr.f32.mxu0 0.0
    %369 = vmatmul.mubr.f32.gmra.mrb[0].mxu0 %v107
    %v370 = vpop.f32.mrb[0].mxu0
    %v371 = vadd.f32 %v94, %v370
    %v372 = vpop.f32.mrb[0].mxu0
    %373 = vmatprep.mubr.f32.mxu0 0.0
    %374 = vmatmul.mubr.f32.gmra.mrb[0].mxu0 %v110
    %v375 = vpop.f32.mrb[0].mxu0
    %v376 = vadd.f32 %v94, %v375
    %v377 = vpop.f32.mrb[0].mxu0
    %378 = vmatprep.mubr.f32.mxu0 0.0
    %379 = vmatmul.mubr.f32.gmra.mrb[0].mxu0 %v113
    %v380 = vpop.f32.mrb[0].mxu0
    %v381 = vadd.f32 %v94, %v380
    %v382 = vpop.f32.mrb[0].mxu0
    %383 = vmatprep.mubr.f32.mxu0 0.0
    %384 = vmatmul.mubr.f32.gmra.mrb[0].mxu0 %v116
    %v385 = vpop.f32.mrb[0].mxu0
    %v386 = vadd.f32 %v94, %v385
    %v387 = vpop.f32.mrb[0].mxu0
    %388 = vmatprep.mubr.f32.mxu0 0.0
    %389 = vmatmul.mubr.f32.gmra.mrb[0].mxu0 %v119
    %v390 = vpop.f32.mrb[0].mxu0
    %v391 = vadd.f32 %v94, %v390
    %v392 = vpop.f32.mrb[0].mxu0
    %393 = vmatprep.mubr.f32.mxu0 0.0
    %394 = vmatmul.mubr.f32.gmra.mrb[0].mxu0 %v122
    %v395 = vpop.f32.mrb[0].mxu0
    %v396 = vadd.f32 %v94, %v395
    %v397 = vpop.f32.mrb[0].mxu0
    %398 = vmatprep.mubr.f32.mxu0 0.0
    %399 = vmatmul.mubr.f32.gmra.mrb[0].mxu0 %v125
    %v400 = vpop.f32.mrb[0].mxu0
    %v401 = vadd.f32 %v94, %v400
    %v402 = vpop.f32.mrb[0].mxu0
    %403 = vmatprep.mubr.f32.mxu0 0.0
    %404 = vmatmul.mubr.f32.gmra.mrb[0].mxu0 %v128
    %v405 = vpop.f32.mrb[0].mxu0
    %v406 = vadd.f32 %v94, %v405
    %v407 = vpop.f32.mrb[0].mxu0
    %408 = vmatprep.mubr.f32.mxu0 0.0
    %409 = vmatmul.mubr.f32.gmra.mrb[0].mxu0 %v131
    %v410 = vpop.f32.mrb[0].mxu0
    %v411 = vadd.f32 %v94, %v410
    %v412 = vpop.f32.mrb[0].mxu0
    %413 = vmatprep.mubr.f32.mxu0 0.0
    %414 = vmatmul.mubr.f32.gmra.mrb[0].mxu0 %v134
    %v415 = vpop.f32.mrb[0].mxu0
    %v416 = vadd.f32 %v94, %v415
    %v417 = vpop.f32.mrb[0].mxu0
    %418 = vmatprep.mubr.f32.mxu0 0.0
    %419 = vmatmul.mubr.f32.gmra.mrb[0].mxu0 %v137
    %v420 = vpop.f32.mrb[0].mxu0
    %v421 = vadd.f32 %v94, %v420
    %v422 = vpop.f32.mrb[0].mxu0
    %423 = vmatprep.mubr.f32.mxu0 0.0
    %424 = vmatmul.mubr.f32.gmra.mrb[0].mxu0 %v140
    %v425 = vpop.f32.mrb[0].mxu0
    %v426 = vadd.f32 %v94, %v425
    %v427 = vpop.f32.mrb[0].mxu0
    %428 = vmatprep.mubr.f32.mxu0 0.0
    %429 = vmatmul.mubr.f32.gmra.mrb[0].mxu0 %v143
    %v430 = vpop.f32.mrb[0].mxu0
    %v431 = vadd.f32 %v94, %v430
    %v432 = vpop.f32.mrb[0].mxu0
    %433 = vmatprep.mubr.f32.mxu0 0.0
    %434 = vmatmul.mubr.f32.gmra.mrb[0].mxu0 %v146
    %v435 = vpop.f32.mrb[0].mxu0
    %v436 = vadd.f32 %v94, %v435
    %v437 = vpop.f32.mrb[0].mxu0
    %438 = vmatprep.mubr.f32.mxu0 0.0
    %439 = vmatmul.mubr.f32.gmra.mrb[0].mxu0 %v149
    %v440 = vpop.f32.mrb[0].mxu0
    %v441 = vadd.f32 %v94, %v440
    %v442 = vpop.f32.mrb[0].mxu0
    %443 = vmatprep.mubr.f32.mxu0 0.0
    %444 = vmatmul.mubr.f32.gmra.mrb[0].mxu0 %v152
    %v445 = vpop.f32.mrb[0].mxu0
    %v446 = vadd.f32 %v94, %v445
    %v447 = vpop.f32.mrb[0].mxu0
    %448 = vmatprep.mubr.f32.mxu0 0.0
    %449 = vmatmul.mubr.f32.gmra.mrb[0].mxu0 %v155
    %v450 = vpop.f32.mrb[0].mxu0
    %v451 = vadd.f32 %v94, %v450
    %v452 = vpop.f32.mrb[0].mxu0
    %453 = vmatprep.mubr.f32.mxu0 0.0
    %454 = vmatmul.mubr.f32.gmra.mrb[0].mxu0 %v158
    %v455 = vpop.f32.mrb[0].mxu0
    %v456 = vadd.f32 %v94, %v455
    %v457 = vpop.f32.mrb[0].mxu0
    %458 = vmatprep.mubr.f32.mxu0 0.0
    %459 = vmatmul.mubr.f32.gmra.mrb[0].mxu0 %v161
    %v460 = vpop.f32.mrb[0].mxu0
    %v461 = vadd.f32 %v94, %v460
    %v462 = vpop.f32.mrb[0].mxu0
    %463 = vmatprep.mubr.f32.mxu0 0.0
    %464 = vmatmul.mubr.f32.gmra.mrb[0].mxu0 %v164
    %v465 = vpop.f32.mrb[0].mxu0
    %v466 = vadd.f32 %v94, %v465
    %v467 = vpop.f32.mrb[0].mxu0
    %468 = vmatprep.mubr.f32.mxu0 0.0
    %469 = vmatmul.mubr.f32.gmra.mrb[0].mxu0 %v167
    %v470 = vpop.f32.mrb[0].mxu0
    %v471 = vadd.f32 %v94, %v470
    %v472 = vpop.f32.mrb[0].mxu0
    %473 = vmatprep.mubr.f32.mxu0 0.0
    %474 = vmatmul.mubr.f32.gmra.mrb[0].mxu0 %v170
    %v475 = vpop.f32.mrb[0].mxu0
    %v476 = vadd.f32 %v94, %v475
    %v477 = vpop.f32.mrb[0].mxu0
    %478 = vmatprep.mubr.f32.mxu0 0.0
    %479 = vmatmul.mubr.f32.gmra.mrb[0].mxu0 %v173
    %v480 = vpop.f32.mrb[0].mxu0
    %v481 = vadd.f32 %v94, %v480
    %v482 = vpop.f32.mrb[0].mxu0
    %483 = vmatprep.mubr.f32.mxu0 0.0
    %484 = vmatmul.mubr.f32.gmra.mrb[0].mxu0 %v176
    %v485 = vpop.f32.mrb[0].mxu0
    %v486 = vadd.f32 %v94, %v485
    %v487 = vpop.f32.mrb[0].mxu0
    %488 = vmatprep.mubr.f32.mxu0 0.0
    %489 = vmatmul.mubr.f32.gmra.mrb[0].mxu0 %v179
    %v490 = vpop.f32.mrb[0].mxu0
    %v491 = vadd.f32 %v94, %v490
    %v492 = vpop.f32.mrb[0].mxu0
    %493 = vmatprep.mubr.f32.mxu0 0.0
    %494 = vmatmul.mubr.f32.gmra.mrb[0].mxu0 %v182
    %v495 = vpop.f32.mrb[0].mxu0
    %v496 = vadd.f32 %v94, %v495
    %v497 = vpop.f32.mrb[0].mxu0
    %498 = vmatprep.mubr.f32.mxu0 0.0
    %499 = vmatmul.mubr.f32.gmra.mrb[0].mxu0 %v185
    %v500 = vpop.f32.mrb[0].mxu0
    %v501 = vadd.f32 %v94, %v500
    %v502 = vpop.f32.mrb[0].mxu0
    %503 = vmatprep.mubr.f32.mxu0 0.0
    %504 = vmatmul.mubr.f32.gmra.mrb[0].mxu0 %v188
    %v505 = vpop.f32.mrb[0].mxu0
    %v506 = vadd.f32 %v94, %v505
    %v507 = vpop.f32.mrb[0].mxu0
    %508 = vmatprep.mubr.f32.mxu0 0.0
    %509 = vmatmul.mubr.f32.gmra.mrb[0].mxu0 %v191
    %v510 = vpop.f32.mrb[0].mxu0
    %v511 = vadd.f32 %v94, %v510
    %v512 = vpop.f32.mrb[0].mxu0
    %513 = vmatprep.mubr.f32.mxu0 0.0
    %514 = vmatmul.mubr.f32.gmra.mrb[0].mxu0 %v194
    %v515 = vpop.f32.mrb[0].mxu0
    %v516 = vadd.f32 %v94, %v515
    %v517 = vpop.f32.mrb[0].mxu0
    %518 = vmatprep.mubr.f32.mxu0 0.0
    %519 = vmatmul.mubr.f32.gmra.mrb[0].mxu0 %v197
    %v520 = vpop.f32.mrb[0].mxu0
    %v521 = vadd.f32 %v94, %v520
    %v522 = vpop.f32.mrb[0].mxu0
    %523 = vmatprep.mubr.f32.mxu0 0.0
    %524 = vmatmul.mubr.f32.gmra.mrb[0].mxu0 %v200
    %v525 = vpop.f32.mrb[0].mxu0
    %v526 = vadd.f32 %v94, %v525
    %v527 = vpop.f32.mrb[0].mxu0
    %528 = vmatprep.mubr.f32.mxu0 0.0
    %529 = vmatmul.mubr.f32.gmra.mrb[0].mxu0 %v203
    %v530 = vpop.f32.mrb[0].mxu0
    %v531 = vadd.f32 %v94, %v530
    %v532 = vpop.f32.mrb[0].mxu0
    %533 = vmatprep.mubr.f32.mxu0 0.0
    %534 = vmatmul.mubr.f32.gmra.mrb[0].mxu0 %v206
    %v535 = vpop.f32.mrb[0].mxu0
    %v536 = vadd.f32 %v94, %v535
    %v537 = vpop.f32.mrb[0].mxu0
    %538 = vmatprep.mubr.f32.mxu0 0.0
    %539 = vmatmul.mubr.f32.gmra.mrb[0].mxu0 %v209
    %v540 = vpop.f32.mrb[0].mxu0
    %v541 = vadd.f32 %v94, %v540
    %v542 = vpop.f32.mrb[0].mxu0
    %543 = vmatprep.mubr.f32.mxu0 0.0
    %544 = vmatmul.mubr.f32.gmra.mrb[0].mxu0 %v212
    %v545 = vpop.f32.mrb[0].mxu0
    %v546 = vadd.f32 %v94, %v545
    %v547 = vpop.f32.mrb[0].mxu0
    %548 = vmatprep.mubr.f32.mxu0 0.0
    %549 = vmatmul.mubr.f32.gmra.mrb[0].mxu0 %v215
    %v550 = vpop.f32.mrb[0].mxu0
    %v551 = vadd.f32 %v94, %v550
    %v552 = vpop.f32.mrb[0].mxu0
    %553 = vmatprep.mubr.f32.mxu0 0.0
    %554 = vmatmul.mubr.f32.gmra.mrb[0].mxu0 %v218
    %v555 = vpop.f32.mrb[0].mxu0
    %v556 = vadd.f32 %v94, %v555
    %v557 = vpop.f32.mrb[0].mxu0
    %558 = vmatprep.mubr.f32.mxu0 0.0
    %559 = vmatmul.mubr.f32.gmra.mrb[0].mxu0 %v221
    %v560 = vpop.f32.mrb[0].mxu0
    %v561 = vadd.f32 %v94, %v560
    %v562 = vpop.f32.mrb[0].mxu0
    %563 = vmatprep.mubr.f32.mxu0 0.0
    %564 = vmatmul.mubr.f32.gmra.mrb[0].mxu0 %v224
    %v565 = vpop.f32.mrb[0].mxu0
    %v566 = vadd.f32 %v94, %v565
    %v567 = vpop.f32.mrb[0].mxu0
    %568 = vmatprep.mubr.f32.mxu0 0.0
    %569 = vmatmul.mubr.f32.gmra.mrb[0].mxu0 %v227
    %v570 = vpop.f32.mrb[0].mxu0
    %v571 = vadd.f32 %v94, %v570
    %v572 = vpop.f32.mrb[0].mxu0
    %573 = vmatprep.mubr.f32.mxu0 0.0
    %574 = vmatmul.mubr.f32.gmra.mrb[0].mxu0 %v230
    %v575 = vpop.f32.mrb[0].mxu0
    %v576 = vadd.f32 %v94, %v575
    %v577 = vpop.f32.mrb[0].mxu0
    %578 = vmatprep.mubr.f32.mxu0 0.0
    %579 = vmatmul.mubr.f32.gmra.mrb[0].mxu0 %v233
    %v580 = vpop.f32.mrb[0].mxu0
    %v581 = vadd.f32 %v94, %v580
    %v582 = vpop.f32.mrb[0].mxu0
    %583 = vmatprep.mubr.f32.mxu0 0.0
    %584 = vmatmul.mubr.f32.gmra.mrb[0].mxu0 %v236
    %v585 = vpop.f32.mrb[0].mxu0
    %v586 = vadd.f32 %v94, %v585
    %v587 = vpop.f32.mrb[0].mxu0
    %588 = vmatprep.mubr.f32.mxu0 0.0
    %589 = vmatmul.mubr.f32.gmra.mrb[0].mxu0 %v239
    %v590 = vpop.f32.mrb[0].mxu0
    %v591 = vadd.f32 %v94, %v590
    %v592 = vpop.f32.mrb[0].mxu0
    %593 = vmatprep.mubr.f32.mxu0 0.0
    %594 = vmatmul.mubr.f32.gmra.mrb[0].mxu0 %v242
    %v595 = vpop.f32.mrb[0].mxu0
    %v596 = vadd.f32 %v94, %v595
    %v597 = vpop.f32.mrb[0].mxu0
    %598 = vmatprep.mubr.f32.mxu0 0.0
    %599 = vmatmul.mubr.f32.gmra.mrb[0].mxu0 %v245
    %v600 = vpop.f32.mrb[0].mxu0
    %v601 = vadd.f32 %v94, %v600
    %v602 = vpop.f32.mrb[0].mxu0
    %603 = vmatprep.mubr.f32.mxu0 0.0
    %604 = vmatmul.mubr.f32.gmra.mrb[0].mxu0 %v248
    %v605 = vpop.f32.mrb[0].mxu0
    %v606 = vadd.f32 %v94, %v605
    %v607 = vpop.f32.mrb[0].mxu0
    %608 = vmatprep.mubr.f32.mxu0 0.0
    %609 = vmatmul.mubr.f32.gmra.mrb[0].mxu0 %v251
    %v610 = vpop.f32.mrb[0].mxu0
    %v611 = vadd.f32 %v94, %v610
    %v612 = vpop.f32.mrb[0].mxu0
    %613 = vmatprep.mubr.f32.mxu0 0.0
    %614 = vmatmul.mubr.f32.gmra.mrb[0].mxu0 %v254
    %v615 = vpop.f32.mrb[0].mxu0
    %v616 = vadd.f32 %v94, %v615
    %v617 = vpop.f32.mrb[0].mxu0
    %618 = vmatprep.mubr.f32.mxu0 0.0
    %619 = vmatmul.mubr.f32.gmra.mrb[0].mxu0 %v257
    %v620 = vpop.f32.mrb[0].mxu0
    %v621 = vadd.f32 %v94, %v620
    %v622 = vpop.f32.mrb[0].mxu0
    %623 = vmatprep.mubr.f32.mxu0 0.0
    %624 = vmatmul.mubr.f32.gmra.mrb[0].mxu0 %v260
    %v625 = vpop.f32.mrb[0].mxu0
    %v626 = vadd.f32 %v94, %v625
    %v627 = vpop.f32.mrb[0].mxu0
    %628 = vmatprep.mubr.f32.mxu0 0.0
    %629 = vmatmul.mubr.f32.gmra.mrb[0].mxu0 %v263
    %v630 = vpop.f32.mrb[0].mxu0
    %v631 = vadd.f32 %v94, %v630
    %v632 = vpop.f32.mrb[0].mxu0
    %633 = vmatprep.mubr.f32.mxu0 0.0
    %634 = vmatmul.mubr.f32.gmra.mrb[0].mxu0 %v266
    %v635 = vpop.f32.mrb[0].mxu0
    %v636 = vadd.f32 %v94, %v635
    %v637 = vpop.f32.mrb[0].mxu0
    %638 = vmatprep.mubr.f32.mxu0 0.0
    %639 = vmatmul.mubr.f32.gmra.mrb[0].mxu0 %v269
    %v640 = vpop.f32.mrb[0].mxu0
    %v641 = vadd.f32 %v94, %v640
    %v642 = vpop.f32.mrb[0].mxu0
    %643 = vmatprep.mubr.f32.mxu0 0.0
    %644 = vmatmul.mubr.f32.gmra.mrb[0].mxu0 %v272
    %v645 = vpop.f32.mrb[0].mxu0
    %v646 = vadd.f32 %v94, %v645
    %v647 = vpop.f32.mrb[0].mxu0
    %648 = vmatprep.mubr.f32.mxu0 0.0
    %649 = vmatmul.mubr.f32.gmra.mrb[0].mxu0 %v275
    %v650 = vpop.f32.mrb[0].mxu0
    %v651 = vadd.f32 %v94, %v650
    %v652 = vpop.f32.mrb[0].mxu0
    %653 = vmatprep.mubr.f32.mxu0 0.0
    %654 = vmatmul.mubr.f32.gmra.mrb[0].mxu0 %v278
    %v655 = vpop.f32.mrb[0].mxu0
    %v656 = vadd.f32 %v94, %v655
    %v657 = vpop.f32.mrb[0].mxu0
    %658 = vmatprep.mubr.f32.mxu0 0.0
    %659 = vmatmul.mubr.f32.gmra.mrb[0].mxu0 %v281
    %v660 = vpop.f32.mrb[0].mxu0
    %v661 = vadd.f32 %v94, %v660
    %v662 = vpop.f32.mrb[0].mxu0
    %663 = vmatprep.mubr.f32.mxu0 0.0
    %664 = vmatmul.mubr.f32.gmra.mrb[0].mxu0 %v284
    %v665 = vpop.f32.mrb[0].mxu0
    %v666 = vadd.f32 %v94, %v665
    %v667 = vpop.f32.mrb[0].mxu0
    %668 = vmatprep.mubr.f32.mxu0 0.0
    %669 = vmatmul.mubr.f32.gmra.mrb[0].mxu0 %v287
    %v670 = vpop.f32.mrb[0].mxu0
    %v671 = vadd.f32 %v94, %v670
    %v672 = vpop.f32.mrb[0].mxu0
    %673 = vdwg.mxu0
    %v674 = vmax.f32 %v356, 0.0
    %v675 = vmax.f32 %v361, 0.0
    %v676 = vmax.f32 %v366, 0.0
    %v677 = vmax.f32 %v371, 0.0
    %v678 = vmax.f32 %v376, 0.0
    %v679 = vmax.f32 %v381, 0.0
    %v680 = vmax.f32 %v386, 0.0
    %v681 = vmax.f32 %v391, 0.0
    %v682 = vmax.f32 %v396, 0.0
    %v683 = vmax.f32 %v401, 0.0
    %v684 = vmax.f32 %v406, 0.0
    %v685 = vmax.f32 %v411, 0.0
    %v686 = vmax.f32 %v416, 0.0
    %v687 = vmax.f32 %v421, 0.0
    %v688 = vmax.f32 %v426, 0.0
    %v689 = vmax.f32 %v431, 0.0
    %v690 = vmax.f32 %v436, 0.0
    %v691 = vmax.f32 %v441, 0.0
    %v692 = vmax.f32 %v446, 0.0
    %v693 = vmax.f32 %v451, 0.0
    %v694 = vmax.f32 %v456, 0.0
    %v695 = vmax.f32 %v461, 0.0
    %v696 = vmax.f32 %v466, 0.0
    %v697 = vmax.f32 %v471, 0.0
    %v698 = vmax.f32 %v476, 0.0
    %v699 = vmax.f32 %v481, 0.0
    %v700 = vmax.f32 %v486, 0.0
    %v701 = vmax.f32 %v491, 0.0
    %v702 = vmax.f32 %v496, 0.0
    %v703 = vmax.f32 %v501, 0.0
    %v704 = vmax.f32 %v506, 0.0
    %v705 = vmax.f32 %v511, 0.0
    %v706 = vmax.f32 %v516, 0.0
    %v707 = vmax.f32 %v521, 0.0
    %v708 = vmax.f32 %v526, 0.0
    %v709 = vmax.f32 %v531, 0.0
    %v710 = vmax.f32 %v536, 0.0
    %v711 = vmax.f32 %v541, 0.0
    %v712 = vmax.f32 %v546, 0.0
    %v713 = vmax.f32 %v551, 0.0
    %v714 = vmax.f32 %v556, 0.0
    %v715 = vmax.f32 %v561, 0.0
    %v716 = vmax.f32 %v566, 0.0
    %v717 = vmax.f32 %v571, 0.0
    %v718 = vmax.f32 %v576, 0.0
    %v719 = vmax.f32 %v581, 0.0
    %v720 = vmax.f32 %v586, 0.0
    %v721 = vmax.f32 %v591, 0.0
    %v722 = vmax.f32 %v596, 0.0
    %v723 = vmax.f32 %v601, 0.0
    %v724 = vmax.f32 %v606, 0.0
    %v725 = vmax.f32 %v611, 0.0
    %v726 = vmax.f32 %v616, 0.0
    %v727 = vmax.f32 %v621, 0.0
    %v728 = vmax.f32 %v626, 0.0
    %v729 = vmax.f32 %v631, 0.0
    %v730 = vmax.f32 %v636, 0.0
    %v731 = vmax.f32 %v641, 0.0
    %v732 = vmax.f32 %v646, 0.0
    %v733 = vmax.f32 %v651, 0.0
    %v734 = vmax.f32 %v656, 0.0
    %v735 = vmax.f32 %v661, 0.0
    %v736 = vmax.f32 %v666, 0.0
    %v737 = vmax.f32 %v671, 0.0
    %v738 = vld [vmem:[%s3] sm:$0xff]
    %v739 = vld [vmem:[%s3 + $0x8] sm:$0xff]
    %v740 = vld [vmem:[%s3 + $0x10] sm:$0xff]
    %v741 = vld [vmem:[%s3 + $0x18] sm:$0xff]
    %v742 = vld [vmem:[%s3 + $0x20] sm:$0xff]
    %v743 = vld [vmem:[%s3 + $0x28] sm:$0xff]
    %v744 = vld [vmem:[%s3 + $0x30] sm:$0xff]
    %v745 = vld [vmem:[%s3 + $0x38] sm:$0xff]
    %v746 = vld [vmem:[%s3 + $0x40] sm:$0xff]
    %v747 = vld [vmem:[%s3 + $0x48] sm:$0xff]
    %v748 = vld [vmem:[%s3 + $0x50] sm:$0xff]
    %v749 = vld [vmem:[%s3 + $0x58] sm:$0xff]
    %v750 = vld [vmem:[%s3 + $0x60] sm:$0xff]
    %v751 = vld [vmem:[%s3 + $0x68] sm:$0xff]
    %v752 = vld [vmem:[%s3 + $0x70] sm:$0xff]
    %v753 = vld [vmem:[%s3 + $0x78] sm:$0xff]
    %v754 = vld [vmem:[%s4] sm:$0x1]
    %v756 = vlaneseq
    %v757 = vshrl.u32 %v756, 7
    %v758 = vsub.s32 0, %v757
    %v759 = vrot.slane %v754, %v758
    %761 = vmatprep.subr.mxu0 0.0
    %762 = vmatpush1.msra.mxu0 %v738
    %763 = vmatprep.subr.mxu0 0.0
    %764 = vmatpush1.msra.mxu0 %v739
    %765 = vmatprep.subr.mxu0 0.0
    %766 = vmatpush1.msra.mxu0 %v740
    %767 = vmatprep.subr.mxu0 0.0
    %768 = vmatpush1.msra.mxu0 %v741
    %769 = vmatprep.subr.mxu0 0.0
    %770 = vmatpush1.msra.mxu0 %v742
    %771 = vmatprep.subr.mxu0 0.0
    %772 = vmatpush1.msra.mxu0 %v743
    %773 = vmatprep.subr.mxu0 0.0
    %774 = vmatpush1.msra.mxu0 %v744
    %775 = vmatprep.subr.mxu0 0.0
    %776 = vmatpush1.msra.mxu0 %v745
    %777 = vmatprep.subr.mxu0 0.0
    %778 = vmatpush1.msra.mxu0 %v746
    %779 = vmatprep.subr.mxu0 0.0
    %780 = vmatpush1.msra.mxu0 %v747
    %781 = vmatprep.subr.mxu0 0.0
    %782 = vmatpush1.msra.mxu0 %v748
    %783 = vmatprep.subr.mxu0 0.0
    %784 = vmatpush1.msra.mxu0 %v749
    %785 = vmatprep.subr.mxu0 0.0
    %786 = vmatpush1.msra.mxu0 %v750
    %787 = vmatprep.subr.mxu0 0.0
    %788 = vmatpush1.msra.mxu0 %v751
    %789 = vmatprep.subr.mxu0 0.0
    %790 = vmatpush1.msra.mxu0 %v752
    %791 = vmatprep.subr.mxu0 0.0
    %792 = vmatpush1.msra.mxu0 %v753
    %793 = vmatprep.subr.mxu0 0.0
    %794 = vmatpush1.msra.mxu0 0.0
    %795 = vmatprep.subr.mxu0 0.0
    %796 = vmatpush1.msra.mxu0 0.0
    %797 = vmatprep.subr.mxu0 0.0
    %798 = vmatpush1.msra.mxu0 0.0
    %799 = vmatprep.subr.mxu0 0.0
    %800 = vmatpush1.msra.mxu0 0.0
    %801 = vmatprep.subr.mxu0 0.0
    %802 = vmatpush1.msra.mxu0 0.0
    %803 = vmatprep.subr.mxu0 0.0
    %804 = vmatpush1.msra.mxu0 0.0
    %805 = vmatprep.subr.mxu0 0.0
    %806 = vmatpush1.msra.mxu0 0.0
    %807 = vmatprep.subr.mxu0 0.0
    %808 = vmatpush1.msra.mxu0 0.0
    %809 = vmatprep.subr.mxu0 0.0
    %810 = vmatpush1.msra.mxu0 0.0
    %811 = vmatprep.subr.mxu0 0.0
    %812 = vmatpush1.msra.mxu0 0.0
    %813 = vmatprep.subr.mxu0 0.0
    %814 = vmatpush1.msra.mxu0 0.0
    %815 = vmatprep.subr.mxu0 0.0
    %816 = vmatpush1.msra.mxu0 0.0
    %817 = vmatprep.subr.mxu0 0.0
    %818 = vmatpush1.msra.mxu0 0.0
    %819 = vmatprep.subr.mxu0 0.0
    %820 = vmatpush1.msra.mxu0 0.0
    %821 = vmatprep.subr.mxu0 0.0
    %822 = vmatpush1.msra.mxu0 0.0
    %823 = vmatprep.subr.mxu0 0.0
    %824 = vmatpush1.msra.mxu0 0.0
    %825 = vmatprep.mubr.f32.mxu0 0.0
    %826 = vmatmul.mubr.f32.gmra.mrb[0].mxu0 %v674
    %v827 = vpop.f32.mrb[0].mxu0
    %v828 = vadd.f32 %v759, %v827
    %v829 = vpop.f32.mrb[0].mxu0
    %830 = vmatprep.mubr.f32.mxu0 0.0
    %831 = vmatmul.mubr.f32.gmra.mrb[0].mxu0 %v675
    %v832 = vpop.f32.mrb[0].mxu0
    %v833 = vadd.f32 %v759, %v832
    %v834 = vpop.f32.mrb[0].mxu0
    %835 = vmatprep.mubr.f32.mxu0 0.0
    %836 = vmatmul.mubr.f32.gmra.mrb[0].mxu0 %v676
    %v837 = vpop.f32.mrb[0].mxu0
    %v838 = vadd.f32 %v759, %v837
    %v839 = vpop.f32.mrb[0].mxu0
    %840 = vmatprep.mubr.f32.mxu0 0.0
    %841 = vmatmul.mubr.f32.gmra.mrb[0].mxu0 %v677
    %v842 = vpop.f32.mrb[0].mxu0
    %v843 = vadd.f32 %v759, %v842
    %v844 = vpop.f32.mrb[0].mxu0
    %845 = vmatprep.mubr.f32.mxu0 0.0
    %846 = vmatmul.mubr.f32.gmra.mrb[0].mxu0 %v678
    %v847 = vpop.f32.mrb[0].mxu0
    %v848 = vadd.f32 %v759, %v847
    %v849 = vpop.f32.mrb[0].mxu0
    %850 = vmatprep.mubr.f32.mxu0 0.0
    %851 = vmatmul.mubr.f32.gmra.mrb[0].mxu0 %v679
    %v852 = vpop.f32.mrb[0].mxu0
    %v853 = vadd.f32 %v759, %v852
    %v854 = vpop.f32.mrb[0].mxu0
    %855 = vmatprep.mubr.f32.mxu0 0.0
    %856 = vmatmul.mubr.f32.gmra.mrb[0].mxu0 %v680
    %v857 = vpop.f32.mrb[0].mxu0
    %v858 = vadd.f32 %v759, %v857
    %v859 = vpop.f32.mrb[0].mxu0
    %860 = vmatprep.mubr.f32.mxu0 0.0
    %861 = vmatmul.mubr.f32.gmra.mrb[0].mxu0 %v681
    %v862 = vpop.f32.mrb[0].mxu0
    %v863 = vadd.f32 %v759, %v862
    %v864 = vpop.f32.mrb[0].mxu0
    %865 = vmatprep.mubr.f32.mxu0 0.0
    %866 = vmatmul.mubr.f32.gmra.mrb[0].mxu0 %v682
    %v867 = vpop.f32.mrb[0].mxu0
    %v868 = vadd.f32 %v759, %v867
    %v869 = vpop.f32.mrb[0].mxu0
    %870 = vmatprep.mubr.f32.mxu0 0.0
    %871 = vmatmul.mubr.f32.gmra.mrb[0].mxu0 %v683
    %v872 = vpop.f32.mrb[0].mxu0
    %v873 = vadd.f32 %v759, %v872
    %v874 = vpop.f32.mrb[0].mxu0
    %875 = vmatprep.mubr.f32.mxu0 0.0
    %876 = vmatmul.mubr.f32.gmra.mrb[0].mxu0 %v684
    %v877 = vpop.f32.mrb[0].mxu0
    %v878 = vadd.f32 %v759, %v877
    %v879 = vpop.f32.mrb[0].mxu0
    %880 = vmatprep.mubr.f32.mxu0 0.0
    %881 = vmatmul.mubr.f32.gmra.mrb[0].mxu0 %v685
    %v882 = vpop.f32.mrb[0].mxu0
    %v883 = vadd.f32 %v759, %v882
    %v884 = vpop.f32.mrb[0].mxu0
    %885 = vmatprep.mubr.f32.mxu0 0.0
    %886 = vmatmul.mubr.f32.gmra.mrb[0].mxu0 %v686
    %v887 = vpop.f32.mrb[0].mxu0
    %v888 = vadd.f32 %v759, %v887
    %v889 = vpop.f32.mrb[0].mxu0
    %890 = vmatprep.mubr.f32.mxu0 0.0
    %891 = vmatmul.mubr.f32.gmra.mrb[0].mxu0 %v687
    %v892 = vpop.f32.mrb[0].mxu0
    %v893 = vadd.f32 %v759, %v892
    %v894 = vpop.f32.mrb[0].mxu0
    %895 = vmatprep.mubr.f32.mxu0 0.0
    %896 = vmatmul.mubr.f32.gmra.mrb[0].mxu0 %v688
    %v897 = vpop.f32.mrb[0].mxu0
    %v898 = vadd.f32 %v759, %v897
    %v899 = vpop.f32.mrb[0].mxu0
    %900 = vmatprep.mubr.f32.mxu0 0.0
    %901 = vmatmul.mubr.f32.gmra.mrb[0].mxu0 %v689
    %v902 = vpop.f32.mrb[0].mxu0
    %v903 = vadd.f32 %v759, %v902
    %v904 = vpop.f32.mrb[0].mxu0
    %905 = vmatprep.mubr.f32.mxu0 0.0
    %906 = vmatmul.mubr.f32.gmra.mrb[0].mxu0 %v690
    %v907 = vpop.f32.mrb[0].mxu0
    %v908 = vadd.f32 %v759, %v907
    %v909 = vpop.f32.mrb[0].mxu0
    %910 = vmatprep.mubr.f32.mxu0 0.0
    %911 = vmatmul.mubr.f32.gmra.mrb[0].mxu0 %v691
    %v912 = vpop.f32.mrb[0].mxu0
    %v913 = vadd.f32 %v759, %v912
    %v914 = vpop.f32.mrb[0].mxu0
    %915 = vmatprep.mubr.f32.mxu0 0.0
    %916 = vmatmul.mubr.f32.gmra.mrb[0].mxu0 %v692
    %v917 = vpop.f32.mrb[0].mxu0
    %v918 = vadd.f32 %v759, %v917
    %v919 = vpop.f32.mrb[0].mxu0
    %920 = vmatprep.mubr.f32.mxu0 0.0
    %921 = vmatmul.mubr.f32.gmra.mrb[0].mxu0 %v693
    %v922 = vpop.f32.mrb[0].mxu0
    %v923 = vadd.f32 %v759, %v922
    %v924 = vpop.f32.mrb[0].mxu0
    %925 = vmatprep.mubr.f32.mxu0 0.0
    %926 = vmatmul.mubr.f32.gmra.mrb[0].mxu0 %v694
    %v927 = vpop.f32.mrb[0].mxu0
    %v928 = vadd.f32 %v759, %v927
    %v929 = vpop.f32.mrb[0].mxu0
    %930 = vmatprep.mubr.f32.mxu0 0.0
    %931 = vmatmul.mubr.f32.gmra.mrb[0].mxu0 %v695
    %v932 = vpop.f32.mrb[0].mxu0
    %v933 = vadd.f32 %v759, %v932
    %v934 = vpop.f32.mrb[0].mxu0
    %935 = vmatprep.mubr.f32.mxu0 0.0
    %936 = vmatmul.mubr.f32.gmra.mrb[0].mxu0 %v696
    %v937 = vpop.f32.mrb[0].mxu0
    %v938 = vadd.f32 %v759, %v937
    %v939 = vpop.f32.mrb[0].mxu0
    %940 = vmatprep.mubr.f32.mxu0 0.0
    %941 = vmatmul.mubr.f32.gmra.mrb[0].mxu0 %v697
    %v942 = vpop.f32.mrb[0].mxu0
    %v943 = vadd.f32 %v759, %v942
    %v944 = vpop.f32.mrb[0].mxu0
    %945 = vmatprep.mubr.f32.mxu0 0.0
    %946 = vmatmul.mubr.f32.gmra.mrb[0].mxu0 %v698
    %v947 = vpop.f32.mrb[0].mxu0
    %v948 = vadd.f32 %v759, %v947
    %v949 = vpop.f32.mrb[0].mxu0
    %950 = vmatprep.mubr.f32.mxu0 0.0
    %951 = vmatmul.mubr.f32.gmra.mrb[0].mxu0 %v699
    %v952 = vpop.f32.mrb[0].mxu0
    %v953 = vadd.f32 %v759, %v952
    %v954 = vpop.f32.mrb[0].mxu0
    %955 = vmatprep.mubr.f32.mxu0 0.0
    %956 = vmatmul.mubr.f32.gmra.mrb[0].mxu0 %v700
    %v957 = vpop.f32.mrb[0].mxu0
    %v958 = vadd.f32 %v759, %v957
    %v959 = vpop.f32.mrb[0].mxu0
    %960 = vmatprep.mubr.f32.mxu0 0.0
    %961 = vmatmul.mubr.f32.gmra.mrb[0].mxu0 %v701
    %v962 = vpop.f32.mrb[0].mxu0
    %v963 = vadd.f32 %v759, %v962
    %v964 = vpop.f32.mrb[0].mxu0
    %965 = vmatprep.mubr.f32.mxu0 0.0
    %966 = vmatmul.mubr.f32.gmra.mrb[0].mxu0 %v702
    %v967 = vpop.f32.mrb[0].mxu0
    %v968 = vadd.f32 %v759, %v967
    %v969 = vpop.f32.mrb[0].mxu0
    %970 = vmatprep.mubr.f32.mxu0 0.0
    %971 = vmatmul.mubr.f32.gmra.mrb[0].mxu0 %v703
    %v972 = vpop.f32.mrb[0].mxu0
    %v973 = vadd.f32 %v759, %v972
    %v974 = vpop.f32.mrb[0].mxu0
    %975 = vmatprep.mubr.f32.mxu0 0.0
    %976 = vmatmul.mubr.f32.gmra.mrb[0].mxu0 %v704
    %v977 = vpop.f32.mrb[0].mxu0
    %v978 = vadd.f32 %v759, %v977
    %v979 = vpop.f32.mrb[0].mxu0
    %980 = vmatprep.mubr.f32.mxu0 0.0
    %981 = vmatmul.mubr.f32.gmra.mrb[0].mxu0 %v705
    %v982 = vpop.f32.mrb[0].mxu0
    %v983 = vadd.f32 %v759, %v982
    %v984 = vpop.f32.mrb[0].mxu0
    %985 = vmatprep.mubr.f32.mxu0 0.0
    %986 = vmatmul.mubr.f32.gmra.mrb[0].mxu0 %v706
    %v987 = vpop.f32.mrb[0].mxu0
    %v988 = vadd.f32 %v759, %v987
    %v989 = vpop.f32.mrb[0].mxu0
    %990 = vmatprep.mubr.f32.mxu0 0.0
    %991 = vmatmul.mubr.f32.gmra.mrb[0].mxu0 %v707
    %v992 = vpop.f32.mrb[0].mxu0
    %v993 = vadd.f32 %v759, %v992
    %v994 = vpop.f32.mrb[0].mxu0
    %995 = vmatprep.mubr.f32.mxu0 0.0
    %996 = vmatmul.mubr.f32.gmra.mrb[0].mxu0 %v708
    %v997 = vpop.f32.mrb[0].mxu0
    %v998 = vadd.f32 %v759, %v997
    %v999 = vpop.f32.mrb[0].mxu0
    %1000 = vmatprep.mubr.f32.mxu0 0.0
    %1001 = vmatmul.mubr.f32.gmra.mrb[0].mxu0 %v709
    %v1002 = vpop.f32.mrb[0].mxu0
    %v1003 = vadd.f32 %v759, %v1002
    %v1004 = vpop.f32.mrb[0].mxu0
    %1005 = vmatprep.mubr.f32.mxu0 0.0
    %1006 = vmatmul.mubr.f32.gmra.mrb[0].mxu0 %v710
    %v1007 = vpop.f32.mrb[0].mxu0
    %v1008 = vadd.f32 %v759, %v1007
    %v1009 = vpop.f32.mrb[0].mxu0
    %1010 = vmatprep.mubr.f32.mxu0 0.0
    %1011 = vmatmul.mubr.f32.gmra.mrb[0].mxu0 %v711
    %v1012 = vpop.f32.mrb[0].mxu0
    %v1013 = vadd.f32 %v759, %v1012
    %v1014 = vpop.f32.mrb[0].mxu0
    %1015 = vmatprep.mubr.f32.mxu0 0.0
    %1016 = vmatmul.mubr.f32.gmra.mrb[0].mxu0 %v712
    %v1017 = vpop.f32.mrb[0].mxu0
    %v1018 = vadd.f32 %v759, %v1017
    %v1019 = vpop.f32.mrb[0].mxu0
    %1020 = vmatprep.mubr.f32.mxu0 0.0
    %1021 = vmatmul.mubr.f32.gmra.mrb[0].mxu0 %v713
    %v1022 = vpop.f32.mrb[0].mxu0
    %v1023 = vadd.f32 %v759, %v1022
    %v1024 = vpop.f32.mrb[0].mxu0
    %1025 = vmatprep.mubr.f32.mxu0 0.0
    %1026 = vmatmul.mubr.f32.gmra.mrb[0].mxu0 %v714
    %v1027 = vpop.f32.mrb[0].mxu0
    %v1028 = vadd.f32 %v759, %v1027
    %v1029 = vpop.f32.mrb[0].mxu0
    %1030 = vmatprep.mubr.f32.mxu0 0.0
    %1031 = vmatmul.mubr.f32.gmra.mrb[0].mxu0 %v715
    %v1032 = vpop.f32.mrb[0].mxu0
    %v1033 = vadd.f32 %v759, %v1032
    %v1034 = vpop.f32.mrb[0].mxu0
    %1035 = vmatprep.mubr.f32.mxu0 0.0
    %1036 = vmatmul.mubr.f32.gmra.mrb[0].mxu0 %v716
    %v1037 = vpop.f32.mrb[0].mxu0
    %v1038 = vadd.f32 %v759, %v1037
    %v1039 = vpop.f32.mrb[0].mxu0
    %1040 = vmatprep.mubr.f32.mxu0 0.0
    %1041 = vmatmul.mubr.f32.gmra.mrb[0].mxu0 %v717
    %v1042 = vpop.f32.mrb[0].mxu0
    %v1043 = vadd.f32 %v759, %v1042
    %v1044 = vpop.f32.mrb[0].mxu0
    %1045 = vmatprep.mubr.f32.mxu0 0.0
    %1046 = vmatmul.mubr.f32.gmra.mrb[0].mxu0 %v718
    %v1047 = vpop.f32.mrb[0].mxu0
    %v1048 = vadd.f32 %v759, %v1047
    %v1049 = vpop.f32.mrb[0].mxu0
    %1050 = vmatprep.mubr.f32.mxu0 0.0
    %1051 = vmatmul.mubr.f32.gmra.mrb[0].mxu0 %v719
    %v1052 = vpop.f32.mrb[0].mxu0
    %v1053 = vadd.f32 %v759, %v1052
    %v1054 = vpop.f32.mrb[0].mxu0
    %1055 = vmatprep.mubr.f32.mxu0 0.0
    %1056 = vmatmul.mubr.f32.gmra.mrb[0].mxu0 %v720
    %v1057 = vpop.f32.mrb[0].mxu0
    %v1058 = vadd.f32 %v759, %v1057
    %v1059 = vpop.f32.mrb[0].mxu0
    %1060 = vmatprep.mubr.f32.mxu0 0.0
    %1061 = vmatmul.mubr.f32.gmra.mrb[0].mxu0 %v721
    %v1062 = vpop.f32.mrb[0].mxu0
    %v1063 = vadd.f32 %v759, %v1062
    %v1064 = vpop.f32.mrb[0].mxu0
    %1065 = vmatprep.mubr.f32.mxu0 0.0
    %1066 = vmatmul.mubr.f32.gmra.mrb[0].mxu0 %v722
    %v1067 = vpop.f32.mrb[0].mxu0
    %v1068 = vadd.f32 %v759, %v1067
    %v1069 = vpop.f32.mrb[0].mxu0
    %1070 = vmatprep.mubr.f32.mxu0 0.0
    %1071 = vmatmul.mubr.f32.gmra.mrb[0].mxu0 %v723
    %v1072 = vpop.f32.mrb[0].mxu0
    %v1073 = vadd.f32 %v759, %v1072
    %v1074 = vpop.f32.mrb[0].mxu0
    %1075 = vmatprep.mubr.f32.mxu0 0.0
    %1076 = vmatmul.mubr.f32.gmra.mrb[0].mxu0 %v724
    %v1077 = vpop.f32.mrb[0].mxu0
    %v1078 = vadd.f32 %v759, %v1077
    %v1079 = vpop.f32.mrb[0].mxu0
    %1080 = vmatprep.mubr.f32.mxu0 0.0
    %1081 = vmatmul.mubr.f32.gmra.mrb[0].mxu0 %v725
    %v1082 = vpop.f32.mrb[0].mxu0
    %v1083 = vadd.f32 %v759, %v1082
    %v1084 = vpop.f32.mrb[0].mxu0
    %1085 = vmatprep.mubr.f32.mxu0 0.0
    %1086 = vmatmul.mubr.f32.gmra.mrb[0].mxu0 %v726
    %v1087 = vpop.f32.mrb[0].mxu0
    %v1088 = vadd.f32 %v759, %v1087
    %v1089 = vpop.f32.mrb[0].mxu0
    %1090 = vmatprep.mubr.f32.mxu0 0.0
    %1091 = vmatmul.mubr.f32.gmra.mrb[0].mxu0 %v727
    %v1092 = vpop.f32.mrb[0].mxu0
    %v1093 = vadd.f32 %v759, %v1092
    %v1094 = vpop.f32.mrb[0].mxu0
    %1095 = vmatprep.mubr.f32.mxu0 0.0
    %1096 = vmatmul.mubr.f32.gmra.mrb[0].mxu0 %v728
    %v1097 = vpop.f32.mrb[0].mxu0
    %v1098 = vadd.f32 %v759, %v1097
    %v1099 = vpop.f32.mrb[0].mxu0
    %1100 = vmatprep.mubr.f32.mxu0 0.0
    %1101 = vmatmul.mubr.f32.gmra.mrb[0].mxu0 %v729
    %v1102 = vpop.f32.mrb[0].mxu0
    %v1103 = vadd.f32 %v759, %v1102
    %v1104 = vpop.f32.mrb[0].mxu0
    %1105 = vmatprep.mubr.f32.mxu0 0.0
    %1106 = vmatmul.mubr.f32.gmra.mrb[0].mxu0 %v730
    %v1107 = vpop.f32.mrb[0].mxu0
    %v1108 = vadd.f32 %v759, %v1107
    %v1109 = vpop.f32.mrb[0].mxu0
    %1110 = vmatprep.mubr.f32.mxu0 0.0
    %1111 = vmatmul.mubr.f32.gmra.mrb[0].mxu0 %v731
    %v1112 = vpop.f32.mrb[0].mxu0
    %v1113 = vadd.f32 %v759, %v1112
    %v1114 = vpop.f32.mrb[0].mxu0
    %1115 = vmatprep.mubr.f32.mxu0 0.0
    %1116 = vmatmul.mubr.f32.gmra.mrb[0].mxu0 %v732
    %v1117 = vpop.f32.mrb[0].mxu0
    %v1118 = vadd.f32 %v759, %v1117
    %v1119 = vpop.f32.mrb[0].mxu0
    %1120 = vmatprep.mubr.f32.mxu0 0.0
    %1121 = vmatmul.mubr.f32.gmra.mrb[0].mxu0 %v733
    %v1122 = vpop.f32.mrb[0].mxu0
    %v1123 = vadd.f32 %v759, %v1122
    %v1124 = vpop.f32.mrb[0].mxu0
    %1125 = vmatprep.mubr.f32.mxu0 0.0
    %1126 = vmatmul.mubr.f32.gmra.mrb[0].mxu0 %v734
    %v1127 = vpop.f32.mrb[0].mxu0
    %v1128 = vadd.f32 %v759, %v1127
    %v1129 = vpop.f32.mrb[0].mxu0
    %1130 = vmatprep.mubr.f32.mxu0 0.0
    %1131 = vmatmul.mubr.f32.gmra.mrb[0].mxu0 %v735
    %v1132 = vpop.f32.mrb[0].mxu0
    %v1133 = vadd.f32 %v759, %v1132
    %v1134 = vpop.f32.mrb[0].mxu0
    %1135 = vmatprep.mubr.f32.mxu0 0.0
    %1136 = vmatmul.mubr.f32.gmra.mrb[0].mxu0 %v736
    %v1137 = vpop.f32.mrb[0].mxu0
    %v1138 = vadd.f32 %v759, %v1137
    %v1139 = vpop.f32.mrb[0].mxu0
    %1140 = vmatprep.mubr.f32.mxu0 0.0
    %1141 = vmatmul.mubr.f32.gmra.mrb[0].mxu0 %v737
    %v1142 = vpop.f32.mrb[0].mxu0
    %v1143 = vadd.f32 %v759, %v1142
    %v1144 = vpop.f32.mrb[0].mxu0
    %1145 = vdwg.mxu0
    %1146 = vst [vmem:[#allocation2] sm:$0xff] %v828
    %1147 = vst [vmem:[#allocation2 + $0x8] sm:$0xff] %v833
    %1148 = vst [vmem:[#allocation2 + $0x10] sm:$0xff] %v838
    %1149 = vst [vmem:[#allocation2 + $0x18] sm:$0xff] %v843
    %1150 = vst [vmem:[#allocation2 + $0x20] sm:$0xff] %v848
    %1151 = vst [vmem:[#allocation2 + $0x28] sm:$0xff] %v853
    %1152 = vst [vmem:[#allocation2 + $0x30] sm:$0xff] %v858
    %1153 = vst [vmem:[#allocation2 + $0x38] sm:$0xff] %v863
    %1154 = vst [vmem:[#allocation2 + $0x40] sm:$0xff] %v868
    %1155 = vst [vmem:[#allocation2 + $0x48] sm:$0xff] %v873
    %1156 = vst [vmem:[#allocation2 + $0x50] sm:$0xff] %v878
    %1157 = vst [vmem:[#allocation2 + $0x58] sm:$0xff] %v883
    %1158 = vst [vmem:[#allocation2 + $0x60] sm:$0xff] %v888
    %1159 = vst [vmem:[#allocation2 + $0x68] sm:$0xff] %v893
    %1160 = vst [vmem:[#allocation2 + $0x70] sm:$0xff] %v898
    %1161 = vst [vmem:[#allocation2 + $0x78] sm:$0xff] %v903
    %1162 = vst [vmem:[#allocation2 + $0x80] sm:$0xff] %v908
    %1163 = vst [vmem:[#allocation2 + $0x88] sm:$0xff] %v913
    %1164 = vst [vmem:[#allocation2 + $0x90] sm:$0xff] %v918
    %1165 = vst [vmem:[#allocation2 + $0x98] sm:$0xff] %v923
    %1166 = vst [vmem:[#allocation2 + $0xa0] sm:$0xff] %v928
    %1167 = vst [vmem:[#allocation2 + $0xa8] sm:$0xff] %v933
    %1168 = vst [vmem:[#allocation2 + $0xb0] sm:$0xff] %v938
    %1169 = vst [vmem:[#allocation2 + $0xb8] sm:$0xff] %v943
    %1170 = vst [vmem:[#allocation2 + $0xc0] sm:$0xff] %v948
    %1171 = vst [vmem:[#allocation2 + $0xc8] sm:$0xff] %v953
    %1172 = vst [vmem:[#allocation2 + $0xd0] sm:$0xff] %v958
    %1173 = vst [vmem:[#allocation2 + $0xd8] sm:$0xff] %v963
    %1174 = vst [vmem:[#allocation2 + $0xe0] sm:$0xff] %v968
    %1175 = vst [vmem:[#allocation2 + $0xe8] sm:$0xff] %v973
    %1176 = vst [vmem:[#allocation2 + $0xf0] sm:$0xff] %v978
    %1177 = vst [vmem:[#allocation2 + $0xf8] sm:$0xff] %v983
    %1178 = vst [vmem:[#allocation2 + $0x100] sm:$0xff] %v988
    %1179 = vst [vmem:[#allocation2 + $0x108] sm:$0xff] %v993
    %1180 = vst [vmem:[#allocation2 + $0x110] sm:$0xff] %v998
    %1181 = vst [vmem:[#allocation2 + $0x118] sm:$0xff] %v1003
    %1182 = vst [vmem:[#allocation2 + $0x120] sm:$0xff] %v1008
    %1183 = vst [vmem:[#allocation2 + $0x128] sm:$0xff] %v1013
    %1184 = vst [vmem:[#allocation2 + $0x130] sm:$0xff] %v1018
    %1185 = vst [vmem:[#allocation2 + $0x138] sm:$0xff] %v1023
    %1186 = vst [vmem:[#allocation2 + $0x140] sm:$0xff] %v1028
    %1187 = vst [vmem:[#allocation2 + $0x148] sm:$0xff] %v1033
    %1188 = vst [vmem:[#allocation2 + $0x150] sm:$0xff] %v1038
    %1189 = vst [vmem:[#allocation2 + $0x158] sm:$0xff] %v1043
    %1190 = vst [vmem:[#allocation2 + $0x160] sm:$0xff] %v1048
    %1191 = vst [vmem:[#allocation2 + $0x168] sm:$0xff] %v1053
    %1192 = vst [vmem:[#allocation2 + $0x170] sm:$0xff] %v1058
    %1193 = vst [vmem:[#allocation2 + $0x178] sm:$0xff] %v1063
    %1194 = vst [vmem:[#allocation2 + $0x180] sm:$0xff] %v1068
    %1195 = vst [vmem:[#allocation2 + $0x188] sm:$0xff] %v1073
    %1196 = vst [vmem:[#allocation2 + $0x190] sm:$0xff] %v1078
    %1197 = vst [vmem:[#allocation2 + $0x198] sm:$0xff] %v1083
    %1198 = vst [vmem:[#allocation2 + $0x1a0] sm:$0xff] %v1088
    %1199 = vst [vmem:[#allocation2 + $0x1a8] sm:$0xff] %v1093
    %1200 = vst [vmem:[#allocation2 + $0x1b0] sm:$0xff] %v1098
    %1201 = vst [vmem:[#allocation2 + $0x1b8] sm:$0xff] %v1103
    %1202 = vst [vmem:[#allocation2 + $0x1c0] sm:$0xff] %v1108
    %1203 = vst [vmem:[#allocation2 + $0x1c8] sm:$0xff] %v1113
    %1204 = vst [vmem:[#allocation2 + $0x1d0] sm:$0xff] %v1118
    %1205 = vst [vmem:[#allocation2 + $0x1d8] sm:$0xff] %v1123
    %1206 = vst [vmem:[#allocation2 + $0x1e0] sm:$0xff] %v1128
    %1207 = vst [vmem:[#allocation2 + $0x1e8] sm:$0xff] %v1133
    %1208 = vst [vmem:[#allocation2 + $0x1f0] sm:$0xff] %v1138
    %1209 = vst [vmem:[#allocation2 + $0x1f8] sm:$0xff] %v1143
    // Predicated region
    $region22: #{tpu_custom_call.1} parent=1 // pred_check
      _
    $region23: #{tpu_custom_call.1} parent=1 // pred_check_branch
      %1211 = sbr.rel (0) target = $region25
    $region24: #{tpu_custom_call.1} parent=1 // pred_region
      %s1213 = ssub.s32 8192, 8192
      %1214 = vsyncadd [#allocation3], %s1213
      %s1215 = sshll.u32 [#allocation2], 4
      %s1216 = int_to_ptr.vmem [resolvable:$true] %s1215
      %1221 = dma.vmem_to_hbm [thread:$0]  %s1216, 8192, %s5, [#allocation3], 128, 128, 8
    $region25: #{tpu_custom_call.1} parent=1 // pred_fallthru
      _
    // Predicated region
    $region26: #{tpu_custom_call.1} parent=1 // pred_check
      _
    $region27: #{tpu_custom_call.1} parent=1 // pred_check_branch
      %1223 = sbr.rel (0) target = $region29
    $region28: #{tpu_custom_call.1} parent=1 // pred_region
      %1224 = dma.done [#allocation3], 8192
    $region29: #{tpu_custom_call.1} parent=1 // pred_fallthru
      _
    %1225 = vsyncpa [#allocation3], 1

</llo_original>
